<compile_context>
chip_gen: v7x
topology: tpu7x:2x2x1
jax: 0.10.0
libtpu: 0.0.40
codegen_flags: <defaults>
</compile_context>

<pallas_src>
import math

import jax
import jax.numpy as jnp
from jax import lax
from jax.experimental import pallas as pl
from jax.experimental.pallas import tpu as pltpu

HIDDEN = 20
OUT = 2


def mlp_kernel(x_ref, w1t_ref, b1_ref, w2_ref, b2_ref, o_ref):
    # x: (TB, F) f32 | w1t: (F, 20) bf16 | b1: (1, 20) f32
    # w2: (2, 20) f32 | b2: (2, 1) f32   | o: (2, TB) f32  (lane-dense, transposed)
    x = x_ref[...].astype(jnp.bfloat16)                    # in-kernel cast (VPU, hidden under DMA)
    h = jnp.dot(x, w1t_ref[...], preferred_element_type=jnp.float32)
    h = jnp.maximum(h + b1_ref[...], 0.0)                  # bias + ReLU (VPU)
    # Transposed second projection -> (OUT, TB): contract HIDDEN dims of w2 and h.
    out_t = lax.dot_general(w2_ref[...], h, (((1,), (1,)), ((), ())),
                            preferred_element_type=jnp.float32)
    o_ref[...] = (out_t + b2_ref[...]).astype(o_ref.dtype)


def prepare_params(w1, b1, w2, b2):
    """One-time parameter prep (transpose + cast) OUTSIDE the per-call hot path."""
    w1t = jnp.asarray(w1).T.astype(jnp.bfloat16)            # (F, 20)
    b1r = jnp.asarray(b1, jnp.float32).reshape(1, HIDDEN)   # (1, 20)
    w2r = jnp.asarray(w2, jnp.float32)                      # (2, 20)  (no transpose needed now)
    b2r = jnp.asarray(b2, jnp.float32).reshape(OUT, 1)      # (2, 1)   broadcasts over lanes
    return w1t, b1r, w2r, b2r


def _choose_tb(B, F):
    """Batch-tile rows: ~8 MiB f32 x tile, multiple of 128 when tiled; small batch -> mult of 16."""
    tb = max(128, min(2048, ((8 << 20) // (F * 4)) // 128 * 128))
    if B <= tb:
        return max(16, ((B + 15) // 16) * 16)               # single tile (block == full array)
    return tb


@jax.jit
def mymodel_forward(x_nchw, w1t, b1r, w2r, b2r):
    """x_nchw: (B, C, H, W) float32; params pre-transposed/cast by prepare_params."""
    B = x_nchw.shape[0]
    F = math.prod(x_nchw.shape[1:])
    x2d = x_nchw.reshape(B, F)                               # nn.Flatten on NCHW (view, no HBM pass)

    TB = _choose_tb(B, F)
    B_pad = ((B + TB - 1) // TB) * TB
    if B_pad != B:
        x2d = jnp.pad(x2d, ((0, B_pad - B), (0, 0)))         # only on ragged batches
    grid = (B_pad // TB,)

    # Double-buffered VMEM footprint (x in, transposed out) + resident weights.
    x_tile_bytes = TB * F * 4
    out_tile_bytes = OUT * TB * 4
    resident = F * HIDDEN * 2 + HIDDEN * 4 + OUT * HIDDEN * 4 + OUT * 4
    vmem_limit = min(2 * (x_tile_bytes + out_tile_bytes) + resident + (8 << 20), 60 << 20)

    flops = 2 * B_pad * F * HIDDEN + 2 * B_pad * HIDDEN * OUT
    bytes_accessed = (B_pad * F * 4             # x (f32, streamed once)
                      + F * HIDDEN * 2          # W1^T (bf16, resident)
                      + OUT * HIDDEN * 4        # W2
                      + (HIDDEN + OUT) * 4      # biases
                      + OUT * B_pad * 4)        # output (lane-dense)

    out_t = pl.pallas_call(
        mlp_kernel,
        out_shape=jax.ShapeDtypeStruct((OUT, B_pad), jnp.float32),
        grid=grid,
        in_specs=[
            pl.BlockSpec((TB, F), lambda i: (i, 0)),          # x: streamed / pipelined
            pl.BlockSpec((F, HIDDEN), lambda i: (0, 0)),      # W1^T: DMA'd once, resident
            pl.BlockSpec((1, HIDDEN), lambda i: (0, 0)),      # b1: resident
            pl.BlockSpec((OUT, HIDDEN), lambda i: (0, 0)),    # W2: resident
            pl.BlockSpec((OUT, 1), lambda i: (0, 0)),         # b2: resident
        ],
        out_specs=pl.BlockSpec((OUT, TB), lambda i: (0, i)),  # lane-dense output tile
        compiler_params=pltpu.CompilerParams(
            dimension_semantics=("parallel",),                # megacore-shardable batch axis
            vmem_limit_bytes=int(vmem_limit)),
        cost_estimate=pl.CostEstimate(
            flops=flops, transcendentals=0, bytes_accessed=bytes_accessed),
    )(x2d, w1t, b1r, w2r, b2r)

    return out_t[:, :B].T                                     # (B, OUT); trivial 2*B-element op


def init_params(key, n_shape):
    """Deterministic init mimicking PyTorch nn.Linear defaults U[-1/sqrt(fan_in), 1/sqrt(fan_in)]."""
    f_in = math.prod(n_shape)
    k1, k2, k3, k4 = jax.random.split(key, 4)
    bound1 = 1.0 / math.sqrt(f_in)
    bound2 = 1.0 / math.sqrt(HIDDEN)
    w1 = jax.random.uniform(k1, (HIDDEN, f_in), jnp.float32, -bound1, bound1)
    b1 = jax.random.uniform(k2, (HIDDEN,), jnp.float32, -bound1, bound1)
    w2 = jax.random.uniform(k3, (OUT, HIDDEN), jnp.float32, -bound2, bound2)
    b2 = jax.random.uniform(k4, (OUT,), jnp.float32, -bound2, bound2)
    return w1, b1, w2, b2


if __name__ == "__main__":
    key = jax.random.PRNGKey(0)
    n_shape = (4, 16, 16)          # (C, H, W) -> F = 1024
    batch = 2

    kx, kp = jax.random.split(key)
    x = jax.random.normal(kx, (batch,) + n_shape, dtype=jnp.float32)
    w1, b1, w2, b2 = init_params(kp, n_shape)

    # One-time param prep (done outside the hot path).
    w1t, b1r, w2r, b2r = prepare_params(w1, b1, w2, b2)

    out = mymodel_forward(x, w1t, b1r, w2r, b2r)
    out = jax.block_until_ready(out)
    assert out.shape == (batch, OUT)

    x2d = x.reshape(batch, -1)

    # Tight check vs. a reference using the same bf16-quantized x / bf16 W1.
    ref_bf = (jnp.maximum(
        x2d.astype(jnp.bfloat16).astype(jnp.float32) @ w1t.astype(jnp.float32)
        + b1r, 0.0) @ w2r.T + b2r.reshape(1, OUT))
    assert jnp.allclose(out, ref_bf, atol=1e-3, rtol=1e-3)

    # Looser check vs. the full-f32 PyTorch-equivalent reference
    # (bf16 quantization inside the kernel -> ~1e-2 relative tolerance).
    ref_f32 = jnp.maximum(x2d @ w1.T + b1, 0.0) @ w2.T + b2
    assert jnp.allclose(out, ref_f32, atol=5e-2, rtol=5e-2)

    print("KERNEL_OK")
</pallas_src>

<mosaic_0001>
module attributes {stable_mosaic.version = 11 : i64} {
  func.func @mlp_kernel(%arg0: i32, %arg1: memref<16x1024xf32, #tpu.memory_space<vmem>>, %arg2: memref<1024x20xbf16, #tpu.memory_space<vmem>>, %arg3: memref<1x20xf32, #tpu.memory_space<vmem>>, %arg4: memref<2x20xf32, #tpu.memory_space<vmem>>, %arg5: memref<2x1xf32, #tpu.memory_space<vmem>>, %arg6: memref<2x16xf32, #tpu.memory_space<vmem>>) attributes {dimension_semantics = [#tpu.dimension_semantics<parallel>], iteration_bounds = array<i64: 1>, scalar_prefetch = 0 : i64, scratch_operands = 0 : i64, tpu.core_type = #tpu.core_type<tc>, window_params = [{transform_indices = @transform_0, window_bounds = array<i64: 16, 1024>}, {pipeline_mode = #tpu.pipeline_mode<synchronous>, transform_indices = @transform_1, window_bounds = array<i64: 1024, 20>}, {pipeline_mode = #tpu.pipeline_mode<synchronous>, transform_indices = @transform_2, window_bounds = array<i64: 1, 20>}, {pipeline_mode = #tpu.pipeline_mode<synchronous>, transform_indices = @transform_3, window_bounds = array<i64: 2, 20>}, {pipeline_mode = #tpu.pipeline_mode<synchronous>, transform_indices = @transform_4, window_bounds = array<i64: 2, 1>}, {transform_indices = @transform_5, window_bounds = array<i64: 2, 16>}]} {
    %c0 = arith.constant 0 : index
    %c0_0 = arith.constant 0 : index
    %0 = vector.load %arg1[%c0, %c0_0] : memref<16x1024xf32, #tpu.memory_space<vmem>>, vector<16x1024xf32>
    %1 = arith.truncf %0 : vector<16x1024xf32> to vector<16x1024xbf16>
    %c0_1 = arith.constant 0 : index
    %c0_2 = arith.constant 0 : index
    %2 = vector.load %arg2[%c0_1, %c0_2] : memref<1024x20xbf16, #tpu.memory_space<vmem>>, vector<1024x20xbf16>
    %cst = arith.constant dense<0.000000e+00> : vector<16x20xf32>
    %3 = tpu.matmul %1, %2, %cst {dimension_numbers = #tpu.dot_dimension_numbers<[1], [0], [0], [1], [0, 0, 1, 1], [], []>} : vector<16x1024xbf16>, vector<1024x20xbf16>, vector<16x20xf32> -> vector<16x20xf32>
    %c0_3 = arith.constant 0 : index
    %c0_4 = arith.constant 0 : index
    %4 = vector.load %arg3[%c0_3, %c0_4] : memref<1x20xf32, #tpu.memory_space<vmem>>, vector<1x20xf32>
    %5 = vector.broadcast %4 : vector<1x20xf32> to vector<16x20xf32>
    %6 = arith.addf %3, %5 : vector<16x20xf32>
    %cst_5 = arith.constant 0.000000e+00 : f32
    %7 = vector.broadcast %cst_5 : f32 to vector<16x20xf32>
    %8 = arith.maximumf %6, %7 : vector<16x20xf32>
    %c0_6 = arith.constant 0 : index
    %c0_7 = arith.constant 0 : index
    %9 = vector.load %arg4[%c0_6, %c0_7] : memref<2x20xf32, #tpu.memory_space<vmem>>, vector<2x20xf32>
    %cst_8 = arith.constant dense<0.000000e+00> : vector<2x16xf32>
    %10 = tpu.matmul %9, %8, %cst_8 {dimension_numbers = #tpu.dot_dimension_numbers<[1], [1], [0], [0], [0, 0, 1, 0], [], []>} : vector<2x20xf32>, vector<16x20xf32>, vector<2x16xf32> -> vector<2x16xf32>
    %c0_9 = arith.constant 0 : index
    %c0_10 = arith.constant 0 : index
    %11 = vector.load %arg5[%c0_9, %c0_10] : memref<2x1xf32, #tpu.memory_space<vmem>>, vector<2x1xf32>
    %12 = vector.broadcast %11 : vector<2x1xf32> to vector<2x16xf32>
    %13 = arith.addf %10, %12 : vector<2x16xf32>
    %c0_11 = arith.constant 0 : index
    %c0_12 = arith.constant 0 : index
    %14 = vector.load %arg6[%c0_11, %c0_12] : memref<2x16xf32, #tpu.memory_space<vmem>>, vector<2x16xf32>
    tpu.vector_store %arg6[%c0_11, %c0_12], %13 {strides = array<i32>} : memref<2x16xf32, #tpu.memory_space<vmem>>, vector<2x16xf32>,
    return
  }
  func.func @transform_0(%arg0: i32) -> (i32, i32) {
    %c0_i32 = arith.constant 0 : i32
    %c0_i32_0 = arith.constant 0 : i32
    return %arg0, %c0_i32 : i32, i32
  }
  func.func @transform_1(%arg0: i32) -> (i32, i32) {
    %c0_i32 = arith.constant 0 : i32
    %c0_i32_0 = arith.constant 0 : i32
    %c0_i32_1 = arith.constant 0 : i32
    return %c0_i32, %c0_i32_0 : i32, i32
  }
  func.func @transform_2(%arg0: i32) -> (i32, i32) {
    %c0_i32 = arith.constant 0 : i32
    %c0_i32_0 = arith.constant 0 : i32
    %c0_i32_1 = arith.constant 0 : i32
    return %c0_i32, %c0_i32_0 : i32, i32
  }
  func.func @transform_3(%arg0: i32) -> (i32, i32) {
    %c0_i32 = arith.constant 0 : i32
    %c0_i32_0 = arith.constant 0 : i32
    %c0_i32_1 = arith.constant 0 : i32
    return %c0_i32, %c0_i32_0 : i32, i32
  }
  func.func @transform_4(%arg0: i32) -> (i32, i32) {
    %c0_i32 = arith.constant 0 : i32
    %c0_i32_0 = arith.constant 0 : i32
    %c0_i32_1 = arith.constant 0 : i32
    return %c0_i32, %c0_i32_0 : i32, i32
  }
  func.func @transform_5(%arg0: i32) -> (i32, i32) {
    %c0_i32 = arith.constant 0 : i32
    %c0_i32_0 = arith.constant 0 : i32
    return %c0_i32, %arg0 : i32, i32
  }
}

</mosaic_0001>

<llo_original>
// kernel: mymodel_forward.1
$region0: #{mymodel_forward.1}
  #allocation0 [shape = 'u32[]', space=smem, size = 0x4, offset = 0x4, fixed_abs, tag = 'smem constant byte address 0x4 - core index']
  #allocation1 [shape = 'u32[144,128]{1,0:T(1,128)}', space=vmem, size = 0x12000, scoped, tag = 'internal scratch']
  %s0 = inlined_call_operand.vmem [shape: f32[16,1024], index: 0, kind: input, shape index: {}]
  %s1 = inlined_call_operand.vmem [shape: bf16[1024,20], index: 1, kind: input, shape index: {}]
  %s2 = inlined_call_operand.vmem [shape: f32[1,20], index: 2, kind: input, shape index: {}]
  %s3 = inlined_call_operand.vmem [shape: f32[2,20], index: 3, kind: input, shape index: {}]
  %s4 = inlined_call_operand.vmem [shape: f32[2,1], index: 4, kind: input, shape index: {}]
  %s5 = inlined_call_operand.vmem [shape: f32[2,16], index: 5, kind: output, shape index: {}]
  %s6 = sld [smem:[#allocation0]]
  $region30: #{mymodel_forward.1} parent=0
    _
  %s8 = ssub.s32 1, %s6
  %s9 = scalar_select 0, %s8, %s6
  // Predicated region
  $region2: #{mymodel_forward.1} parent=0 // pred_check
    _
  $region3: #{mymodel_forward.1} parent=0 // pred_check_branch
    %11 = sbr.rel (0) target = $region5
  $region4: #{mymodel_forward.1} parent=0 // pred_region
    _
  $region5: #{mymodel_forward.1} parent=0 // pred_fallthru
    _
  // Predicated region
  $region6: #{mymodel_forward.1} parent=0 // pred_check
    _
  $region7: #{mymodel_forward.1} parent=0 // pred_check_branch
    %13 = sbr.rel (0) target = $region9
  $region8: #{mymodel_forward.1} parent=0 // pred_region
    _
  $region9: #{mymodel_forward.1} parent=0 // pred_fallthru
    _
  // Predicated region
  $region10: #{mymodel_forward.1} parent=0 // pred_check
    _
  $region11: #{mymodel_forward.1} parent=0 // pred_check_branch
    %15 = sbr.rel (0) target = $region13
  $region12: #{mymodel_forward.1} parent=0 // pred_region
    _
  $region13: #{mymodel_forward.1} parent=0 // pred_fallthru
    _
  // Predicated region
  $region14: #{mymodel_forward.1} parent=0 // pred_check
    _
  $region15: #{mymodel_forward.1} parent=0 // pred_check_branch
    %17 = sbr.rel (0) target = $region17
  $region16: #{mymodel_forward.1} parent=0 // pred_region
    _
  $region17: #{mymodel_forward.1} parent=0 // pred_fallthru
    _
  // Predicated region
  $region18: #{mymodel_forward.1} parent=0 // pred_check
    _
  $region19: #{mymodel_forward.1} parent=0 // pred_check_branch
    %19 = sbr.rel (0) target = $region21
  $region20: #{mymodel_forward.1} parent=0 // pred_region
    _
  $region21: #{mymodel_forward.1} parent=0 // pred_fallthru
    _
  %v21 = vld [vmem:[%s0] sm:$0xff]
  %v22 = vld [vmem:[%s0 + $0x8] sm:$0xff]
  %v23 = vld [vmem:[%s0 + $0x10] sm:$0xff]
  %v24 = vld [vmem:[%s0 + $0x18] sm:$0xff]
  %v25 = vld [vmem:[%s0 + $0x20] sm:$0xff]
  %v26 = vld [vmem:[%s0 + $0x28] sm:$0xff]
  %v27 = vld [vmem:[%s0 + $0x30] sm:$0xff]
  %v28 = vld [vmem:[%s0 + $0x38] sm:$0xff]
  %v29 = vld [vmem:[%s0 + $0x40] sm:$0xff]
  %v30 = vld [vmem:[%s0 + $0x48] sm:$0xff]
  %v31 = vld [vmem:[%s0 + $0x50] sm:$0xff]
  %v32 = vld [vmem:[%s0 + $0x58] sm:$0xff]
  %v33 = vld [vmem:[%s0 + $0x60] sm:$0xff]
  %v34 = vld [vmem:[%s0 + $0x68] sm:$0xff]
  %v35 = vld [vmem:[%s0 + $0x70] sm:$0xff]
  %v36 = vld [vmem:[%s0 + $0x78] sm:$0xff]
  %v37 = vpack.c.bf16 %v29, %v21
  %v38 = vpack.c.bf16 %v30, %v22
  %v39 = vpack.c.bf16 %v31, %v23
  %v40 = vpack.c.bf16 %v32, %v24
  %v41 = vpack.c.bf16 %v33, %v25
  %v42 = vpack.c.bf16 %v34, %v26
  %v43 = vpack.c.bf16 %v35, %v27
  %v44 = vpack.c.bf16 %v36, %v28
  %v45 = vld [vmem:[%s1] sm:$0xf]
  %v46 = vld [vmem:[%s1 + $0x4] sm:$0xf]
  %v47 = vld [vmem:[%s1 + $0x8] sm:$0xf]
  %v48 = vld [vmem:[%s1 + $0xc] sm:$0xf]
  %v49 = vld [vmem:[%s1 + $0x10] sm:$0xf]
  %v50 = vld [vmem:[%s1 + $0x14] sm:$0xf]
  %v51 = vld [vmem:[%s1 + $0x18] sm:$0xf]
  %v52 = vld [vmem:[%s1 + $0x1c] sm:$0xf]
  %v53 = vld [vmem:[%s1 + $0x20] sm:$0xf]
  %v54 = vld [vmem:[%s1 + $0x24] sm:$0xf]
  %v55 = vld [vmem:[%s1 + $0x28] sm:$0xf]
  %v56 = vld [vmem:[%s1 + $0x2c] sm:$0xf]
  %v57 = vld [vmem:[%s1 + $0x30] sm:$0xf]
  %v58 = vld [vmem:[%s1 + $0x34] sm:$0xf]
  %v59 = vld [vmem:[%s1 + $0x38] sm:$0xf]
  %v60 = vld [vmem:[%s1 + $0x3c] sm:$0xf]
  %v61 = vld [vmem:[%s1 + $0x40] sm:$0xf]
  %v62 = vld [vmem:[%s1 + $0x44] sm:$0xf]
  %v63 = vld [vmem:[%s1 + $0x48] sm:$0xf]
  %v64 = vld [vmem:[%s1 + $0x4c] sm:$0xf]
  %v65 = vld [vmem:[%s1 + $0x50] sm:$0xf]
  %v66 = vld [vmem:[%s1 + $0x54] sm:$0xf]
  %v67 = vld [vmem:[%s1 + $0x58] sm:$0xf]
  %v68 = vld [vmem:[%s1 + $0x5c] sm:$0xf]
  %v69 = vld [vmem:[%s1 + $0x60] sm:$0xf]
  %v70 = vld [vmem:[%s1 + $0x64] sm:$0xf]
  %v71 = vld [vmem:[%s1 + $0x68] sm:$0xf]
  %v72 = vld [vmem:[%s1 + $0x6c] sm:$0xf]
  %v73 = vld [vmem:[%s1 + $0x70] sm:$0xf]
  %v74 = vld [vmem:[%s1 + $0x74] sm:$0xf]
  %v75 = vld [vmem:[%s1 + $0x78] sm:$0xf]
  %v76 = vld [vmem:[%s1 + $0x7c] sm:$0xf]
  %v77 = vld [vmem:[%s1 + $0x80] sm:$0xf]
  %v78 = vld [vmem:[%s1 + $0x84] sm:$0xf]
  %v79 = vld [vmem:[%s1 + $0x88] sm:$0xf]
  %v80 = vld [vmem:[%s1 + $0x8c] sm:$0xf]
  %v81 = vld [vmem:[%s1 + $0x90] sm:$0xf]
  %v82 = vld [vmem:[%s1 + $0x94] sm:$0xf]
  %v83 = vld [vmem:[%s1 + $0x98] sm:$0xf]
  %v84 = vld [vmem:[%s1 + $0x9c] sm:$0xf]
  %v85 = vld [vmem:[%s1 + $0xa0] sm:$0xf]
  %v86 = vld [vmem:[%s1 + $0xa4] sm:$0xf]
  %v87 = vld [vmem:[%s1 + $0xa8] sm:$0xf]
  %v88 = vld [vmem:[%s1 + $0xac] sm:$0xf]
  %v89 = vld [vmem:[%s1 + $0xb0] sm:$0xf]
  %v90 = vld [vmem:[%s1 + $0xb4] sm:$0xf]
  %v91 = vld [vmem:[%s1 + $0xb8] sm:$0xf]
  %v92 = vld [vmem:[%s1 + $0xbc] sm:$0xf]
  %v93 = vld [vmem:[%s1 + $0xc0] sm:$0xf]
  %v94 = vld [vmem:[%s1 + $0xc4] sm:$0xf]
  %v95 = vld [vmem:[%s1 + $0xc8] sm:$0xf]
  %v96 = vld [vmem:[%s1 + $0xcc] sm:$0xf]
  %v97 = vld [vmem:[%s1 + $0xd0] sm:$0xf]
  %v98 = vld [vmem:[%s1 + $0xd4] sm:$0xf]
  %v99 = vld [vmem:[%s1 + $0xd8] sm:$0xf]
  %v100 = vld [vmem:[%s1 + $0xdc] sm:$0xf]
  %v101 = vld [vmem:[%s1 + $0xe0] sm:$0xf]
  %v102 = vld [vmem:[%s1 + $0xe4] sm:$0xf]
  %v103 = vld [vmem:[%s1 + $0xe8] sm:$0xf]
  %v104 = vld [vmem:[%s1 + $0xec] sm:$0xf]
  %v105 = vld [vmem:[%s1 + $0xf0] sm:$0xf]
  %v106 = vld [vmem:[%s1 + $0xf4] sm:$0xf]
  %v107 = vld [vmem:[%s1 + $0xf8] sm:$0xf]
  %v108 = vld [vmem:[%s1 + $0xfc] sm:$0xf]
  %v109 = vld [vmem:[%s1 + $0x100] sm:$0xf]
  %v110 = vld [vmem:[%s1 + $0x104] sm:$0xf]
  %v111 = vld [vmem:[%s1 + $0x108] sm:$0xf]
  %v112 = vld [vmem:[%s1 + $0x10c] sm:$0xf]
  %v113 = vld [vmem:[%s1 + $0x110] sm:$0xf]
  %v114 = vld [vmem:[%s1 + $0x114] sm:$0xf]
  %v115 = vld [vmem:[%s1 + $0x118] sm:$0xf]
  %v116 = vld [vmem:[%s1 + $0x11c] sm:$0xf]
  %v117 = vld [vmem:[%s1 + $0x120] sm:$0xf]
  %v118 = vld [vmem:[%s1 + $0x124] sm:$0xf]
  %v119 = vld [vmem:[%s1 + $0x128] sm:$0xf]
  %v120 = vld [vmem:[%s1 + $0x12c] sm:$0xf]
  %v121 = vld [vmem:[%s1 + $0x130] sm:$0xf]
  %v122 = vld [vmem:[%s1 + $0x134] sm:$0xf]
  %v123 = vld [vmem:[%s1 + $0x138] sm:$0xf]
  %v124 = vld [vmem:[%s1 + $0x13c] sm:$0xf]
  %v125 = vld [vmem:[%s1 + $0x140] sm:$0xf]
  %v126 = vld [vmem:[%s1 + $0x144] sm:$0xf]
  %v127 = vld [vmem:[%s1 + $0x148] sm:$0xf]
  %v128 = vld [vmem:[%s1 + $0x14c] sm:$0xf]
  %v129 = vld [vmem:[%s1 + $0x150] sm:$0xf]
  %v130 = vld [vmem:[%s1 + $0x154] sm:$0xf]
  %v131 = vld [vmem:[%s1 + $0x158] sm:$0xf]
  %v132 = vld [vmem:[%s1 + $0x15c] sm:$0xf]
  %v133 = vld [vmem:[%s1 + $0x160] sm:$0xf]
  %v134 = vld [vmem:[%s1 + $0x164] sm:$0xf]
  %v135 = vld [vmem:[%s1 + $0x168] sm:$0xf]
  %v136 = vld [vmem:[%s1 + $0x16c] sm:$0xf]
  %v137 = vld [vmem:[%s1 + $0x170] sm:$0xf]
  %v138 = vld [vmem:[%s1 + $0x174] sm:$0xf]
  %v139 = vld [vmem:[%s1 + $0x178] sm:$0xf]
  %v140 = vld [vmem:[%s1 + $0x17c] sm:$0xf]
  %v141 = vld [vmem:[%s1 + $0x180] sm:$0xf]
  %v142 = vld [vmem:[%s1 + $0x184] sm:$0xf]
  %v143 = vld [vmem:[%s1 + $0x188] sm:$0xf]
  %v144 = vld [vmem:[%s1 + $0x18c] sm:$0xf]
  %v145 = vld [vmem:[%s1 + $0x190] sm:$0xf]
  %v146 = vld [vmem:[%s1 + $0x194] sm:$0xf]
  %v147 = vld [vmem:[%s1 + $0x198] sm:$0xf]
  %v148 = vld [vmem:[%s1 + $0x19c] sm:$0xf]
  %v149 = vld [vmem:[%s1 + $0x1a0] sm:$0xf]
  %v150 = vld [vmem:[%s1 + $0x1a4] sm:$0xf]
  %v151 = vld [vmem:[%s1 + $0x1a8] sm:$0xf]
  %v152 = vld [vmem:[%s1 + $0x1ac] sm:$0xf]
  %v153 = vld [vmem:[%s1 + $0x1b0] sm:$0xf]
  %v154 = vld [vmem:[%s1 + $0x1b4] sm:$0xf]
  %v155 = vld [vmem:[%s1 + $0x1b8] sm:$0xf]
  %v156 = vld [vmem:[%s1 + $0x1bc] sm:$0xf]
  %v157 = vld [vmem:[%s1 + $0x1c0] sm:$0xf]
  %v158 = vld [vmem:[%s1 + $0x1c4] sm:$0xf]
  %v159 = vld [vmem:[%s1 + $0x1c8] sm:$0xf]
  %v160 = vld [vmem:[%s1 + $0x1cc] sm:$0xf]
  %v161 = vld [vmem:[%s1 + $0x1d0] sm:$0xf]
  %v162 = vld [vmem:[%s1 + $0x1d4] sm:$0xf]
  %v163 = vld [vmem:[%s1 + $0x1d8] sm:$0xf]
  %v164 = vld [vmem:[%s1 + $0x1dc] sm:$0xf]
  %v165 = vld [vmem:[%s1 + $0x1e0] sm:$0xf]
  %v166 = vld [vmem:[%s1 + $0x1e4] sm:$0xf]
  %v167 = vld [vmem:[%s1 + $0x1e8] sm:$0xf]
  %v168 = vld [vmem:[%s1 + $0x1ec] sm:$0xf]
  %v169 = vld [vmem:[%s1 + $0x1f0] sm:$0xf]
  %v170 = vld [vmem:[%s1 + $0x1f4] sm:$0xf]
  %v171 = vld [vmem:[%s1 + $0x1f8] sm:$0xf]
  %v172 = vld [vmem:[%s1 + $0x1fc] sm:$0xf]
  %v173 = vld [vmem:[%s2] sm:$0x1]
  %v175 = vlaneseq
  %v176 = vshrl.u32 %v175, 7
  %v177 = vsub.s32 0, %v176
  %v178 = vrot.slane %v173, %v177
  %v308 = vunpack.c.l.b16 %v45
  %v309 = vunpack.c.l.b16 %v46
  %v310 = vunpack.c.l.b16 %v47
  %v311 = vunpack.c.l.b16 %v48
  %v312 = vunpack.c.l.b16 %v49
  %v313 = vunpack.c.l.b16 %v50
  %v314 = vunpack.c.l.b16 %v51
  %v315 = vunpack.c.l.b16 %v52
  %v316 = vunpack.c.l.b16 %v53
  %v317 = vunpack.c.l.b16 %v54
  %v318 = vunpack.c.l.b16 %v55
  %v319 = vunpack.c.l.b16 %v56
  %v320 = vunpack.c.l.b16 %v57
  %v321 = vunpack.c.l.b16 %v58
  %v322 = vunpack.c.l.b16 %v59
  %v323 = vunpack.c.l.b16 %v60
  %v324 = vunpack.c.l.b16 %v61
  %v325 = vunpack.c.l.b16 %v62
  %v326 = vunpack.c.l.b16 %v63
  %v327 = vunpack.c.l.b16 %v64
  %v328 = vunpack.c.l.b16 %v65
  %v329 = vunpack.c.l.b16 %v66
  %v330 = vunpack.c.l.b16 %v67
  %v331 = vunpack.c.l.b16 %v68
  %v332 = vunpack.c.l.b16 %v69
  %v333 = vunpack.c.l.b16 %v70
  %v334 = vunpack.c.l.b16 %v71
  %v335 = vunpack.c.l.b16 %v72
  %v336 = vunpack.c.l.b16 %v73
  %v337 = vunpack.c.l.b16 %v74
  %v338 = vunpack.c.l.b16 %v75
  %v339 = vunpack.c.l.b16 %v76
  %v340 = vunpack.c.l.b16 %v77
  %v341 = vunpack.c.l.b16 %v78
  %v342 = vunpack.c.l.b16 %v79
  %v343 = vunpack.c.l.b16 %v80
  %v344 = vunpack.c.l.b16 %v81
  %v345 = vunpack.c.l.b16 %v82
  %v346 = vunpack.c.l.b16 %v83
  %v347 = vunpack.c.l.b16 %v84
  %v348 = vunpack.c.l.b16 %v85
  %v349 = vunpack.c.l.b16 %v86
  %v350 = vunpack.c.l.b16 %v87
  %v351 = vunpack.c.l.b16 %v88
  %v352 = vunpack.c.l.b16 %v89
  %v353 = vunpack.c.l.b16 %v90
  %v354 = vunpack.c.l.b16 %v91
  %v355 = vunpack.c.l.b16 %v92
  %v356 = vunpack.c.l.b16 %v93
  %v357 = vunpack.c.l.b16 %v94
  %v358 = vunpack.c.l.b16 %v95
  %v359 = vunpack.c.l.b16 %v96
  %v360 = vunpack.c.l.b16 %v97
  %v361 = vunpack.c.l.b16 %v98
  %v362 = vunpack.c.l.b16 %v99
  %v363 = vunpack.c.l.b16 %v100
  %v364 = vunpack.c.l.b16 %v101
  %v365 = vunpack.c.l.b16 %v102
  %v366 = vunpack.c.l.b16 %v103
  %v367 = vunpack.c.l.b16 %v104
  %v368 = vunpack.c.l.b16 %v105
  %v369 = vunpack.c.l.b16 %v106
  %v370 = vunpack.c.l.b16 %v107
  %v371 = vunpack.c.l.b16 %v108
  %v372 = vunpack.c.l.b16 %v109
  %v373 = vunpack.c.l.b16 %v110
  %v374 = vunpack.c.l.b16 %v111
  %v375 = vunpack.c.l.b16 %v112
  %v376 = vunpack.c.l.b16 %v113
  %v377 = vunpack.c.l.b16 %v114
  %v378 = vunpack.c.l.b16 %v115
  %v379 = vunpack.c.l.b16 %v116
  %v380 = vunpack.c.l.b16 %v117
  %v381 = vunpack.c.l.b16 %v118
  %v382 = vunpack.c.l.b16 %v119
  %v383 = vunpack.c.l.b16 %v120
  %v384 = vunpack.c.l.b16 %v121
  %v385 = vunpack.c.l.b16 %v122
  %v386 = vunpack.c.l.b16 %v123
  %v387 = vunpack.c.l.b16 %v124
  %v388 = vunpack.c.l.b16 %v125
  %v389 = vunpack.c.l.b16 %v126
  %v390 = vunpack.c.l.b16 %v127
  %v391 = vunpack.c.l.b16 %v128
  %v392 = vunpack.c.l.b16 %v129
  %v393 = vunpack.c.l.b16 %v130
  %v394 = vunpack.c.l.b16 %v131
  %v395 = vunpack.c.l.b16 %v132
  %v396 = vunpack.c.l.b16 %v133
  %v397 = vunpack.c.l.b16 %v134
  %v398 = vunpack.c.l.b16 %v135
  %v399 = vunpack.c.l.b16 %v136
  %v400 = vunpack.c.l.b16 %v137
  %v401 = vunpack.c.l.b16 %v138
  %v402 = vunpack.c.l.b16 %v139
  %v403 = vunpack.c.l.b16 %v140
  %v404 = vunpack.c.l.b16 %v141
  %v405 = vunpack.c.l.b16 %v142
  %v406 = vunpack.c.l.b16 %v143
  %v407 = vunpack.c.l.b16 %v144
  %v408 = vunpack.c.l.b16 %v145
  %v409 = vunpack.c.l.b16 %v146
  %v410 = vunpack.c.l.b16 %v147
  %v411 = vunpack.c.l.b16 %v148
  %v412 = vunpack.c.l.b16 %v149
  %v413 = vunpack.c.l.b16 %v150
  %v414 = vunpack.c.l.b16 %v151
  %v415 = vunpack.c.l.b16 %v152
  %v416 = vunpack.c.l.b16 %v153
  %v417 = vunpack.c.l.b16 %v154
  %v418 = vunpack.c.l.b16 %v155
  %v419 = vunpack.c.l.b16 %v156
  %v420 = vunpack.c.l.b16 %v157
  %v421 = vunpack.c.l.b16 %v158
  %v422 = vunpack.c.l.b16 %v159
  %v423 = vunpack.c.l.b16 %v160
  %v424 = vunpack.c.l.b16 %v161
  %v425 = vunpack.c.l.b16 %v162
  %v426 = vunpack.c.l.b16 %v163
  %v427 = vunpack.c.l.b16 %v164
  %v428 = vunpack.c.l.b16 %v165
  %v429 = vunpack.c.l.b16 %v166
  %v430 = vunpack.c.l.b16 %v167
  %v431 = vunpack.c.l.b16 %v168
  %v432 = vunpack.c.l.b16 %v169
  %v433 = vunpack.c.l.b16 %v170
  %v434 = vunpack.c.l.b16 %v171
  %v435 = vunpack.c.l.b16 %v172
  %v436 = vpack.c.b16 %v309, %v308
  %v437 = vpack.c.b16 %v311, %v310
  %v438 = vpack.c.b16 %v313, %v312
  %v439 = vpack.c.b16 %v315, %v314
  %v440 = vpack.c.b16 %v317, %v316
  %v441 = vpack.c.b16 %v319, %v318
  %v442 = vpack.c.b16 %v321, %v320
  %v443 = vpack.c.b16 %v323, %v322
  %v444 = vpack.c.b16 %v325, %v324
  %v445 = vpack.c.b16 %v327, %v326
  %v446 = vpack.c.b16 %v329, %v328
  %v447 = vpack.c.b16 %v331, %v330
  %v448 = vpack.c.b16 %v333, %v332
  %v449 = vpack.c.b16 %v335, %v334
  %v450 = vpack.c.b16 %v337, %v336
  %v451 = vpack.c.b16 %v339, %v338
  %v452 = vpack.c.b16 %v341, %v340
  %v453 = vpack.c.b16 %v343, %v342
  %v454 = vpack.c.b16 %v345, %v344
  %v455 = vpack.c.b16 %v347, %v346
  %v456 = vpack.c.b16 %v349, %v348
  %v457 = vpack.c.b16 %v351, %v350
  %v458 = vpack.c.b16 %v353, %v352
  %v459 = vpack.c.b16 %v355, %v354
  %v460 = vpack.c.b16 %v357, %v356
  %v461 = vpack.c.b16 %v359, %v358
  %v462 = vpack.c.b16 %v361, %v360
  %v463 = vpack.c.b16 %v363, %v362
  %v464 = vpack.c.b16 %v365, %v364
  %v465 = vpack.c.b16 %v367, %v366
  %v466 = vpack.c.b16 %v369, %v368
  %v467 = vpack.c.b16 %v371, %v370
  %v468 = vpack.c.b16 %v373, %v372
  %v469 = vpack.c.b16 %v375, %v374
  %v470 = vpack.c.b16 %v377, %v376
  %v471 = vpack.c.b16 %v379, %v378
  %v472 = vpack.c.b16 %v381, %v380
  %v473 = vpack.c.b16 %v383, %v382
  %v474 = vpack.c.b16 %v385, %v384
  %v475 = vpack.c.b16 %v387, %v386
  %v476 = vpack.c.b16 %v389, %v388
  %v477 = vpack.c.b16 %v391, %v390
  %v478 = vpack.c.b16 %v393, %v392
  %v479 = vpack.c.b16 %v395, %v394
  %v480 = vpack.c.b16 %v397, %v396
  %v481 = vpack.c.b16 %v399, %v398
  %v482 = vpack.c.b16 %v401, %v400
  %v483 = vpack.c.b16 %v403, %v402
  %v484 = vpack.c.b16 %v405, %v404
  %v485 = vpack.c.b16 %v407, %v406
  %v486 = vpack.c.b16 %v409, %v408
  %v487 = vpack.c.b16 %v411, %v410
  %v488 = vpack.c.b16 %v413, %v412
  %v489 = vpack.c.b16 %v415, %v414
  %v490 = vpack.c.b16 %v417, %v416
  %v491 = vpack.c.b16 %v419, %v418
  %v492 = vpack.c.b16 %v421, %v420
  %v493 = vpack.c.b16 %v423, %v422
  %v494 = vpack.c.b16 %v425, %v424
  %v495 = vpack.c.b16 %v427, %v426
  %v496 = vpack.c.b16 %v429, %v428
  %v497 = vpack.c.b16 %v431, %v430
  %v498 = vpack.c.b16 %v433, %v432
  %v499 = vpack.c.b16 %v435, %v434
  %564 = vmatprep.subr.bf16.mxu0 0
  %565 = vmatpush1.bf16.msra.mxu0 %v436
  %566 = vmatprep.subr.bf16.mxu0 0
  %567 = vmatpush1.bf16.msra.mxu0 %v437
  %568 = vmatprep.subr.bf16.mxu0 0
  %569 = vmatpush1.bf16.msra.mxu0 %v438
  %570 = vmatprep.subr.bf16.mxu0 0
  %571 = vmatpush1.bf16.msra.mxu0 %v439
  %572 = vmatprep.subr.bf16.mxu0 0
  %573 = vmatpush1.bf16.msra.mxu0 %v440
  %574 = vmatprep.subr.bf16.mxu0 0
  %575 = vmatpush1.bf16.msra.mxu0 %v441
  %576 = vmatprep.subr.bf16.mxu0 0
  %577 = vmatpush1.bf16.msra.mxu0 %v442
  %578 = vmatprep.subr.bf16.mxu0 0
  %579 = vmatpush1.bf16.msra.mxu0 %v443
  %580 = vmatprep.subr.bf16.mxu0 0
  %581 = vmatpush1.bf16.msra.mxu0 %v444
  %582 = vmatprep.subr.bf16.mxu0 0
  %583 = vmatpush1.bf16.msra.mxu0 %v445
  %584 = vmatprep.subr.bf16.mxu0 0
  %585 = vmatpush1.bf16.msra.mxu0 %v446
  %586 = vmatprep.subr.bf16.mxu0 0
  %587 = vmatpush1.bf16.msra.mxu0 %v447
  %588 = vmatprep.subr.bf16.mxu0 0
  %589 = vmatpush1.bf16.msra.mxu0 %v448
  %590 = vmatprep.subr.bf16.mxu0 0
  %591 = vmatpush1.bf16.msra.mxu0 %v449
  %592 = vmatprep.subr.bf16.mxu0 0
  %593 = vmatpush1.bf16.msra.mxu0 %v450
  %594 = vmatprep.subr.bf16.mxu0 0
  %595 = vmatpush1.bf16.msra.mxu0 %v451
  %596 = vmatprep.mubr.bf16.mxu0 %v38
  %597 = vmatmul.mubr.bf16.gmra.mrb[0].mxu0 %v37
  %v598 = vpop.f32.mrb[0].mxu0
  %v599 = vadd.f32 %v178, %v598
  %v600 = vpop.f32.mrb[0].mxu0
  %v601 = vpop.f32.mrb[0].mxu0
  %v602 = vadd.f32 %v178, %v601
  %v603 = vpop.f32.mrb[0].mxu0
  %604 = vdwg.mxu0
  %605 = vmatprep.subr.bf16.mxu0 0
  %606 = vmatpush1.bf16.msra.mxu0 %v452
  %607 = vmatprep.subr.bf16.mxu0 0
  %608 = vmatpush1.bf16.msra.mxu0 %v453
  %609 = vmatprep.subr.bf16.mxu0 0
  %610 = vmatpush1.bf16.msra.mxu0 %v454
  %611 = vmatprep.subr.bf16.mxu0 0
  %612 = vmatpush1.bf16.msra.mxu0 %v455
  %613 = vmatprep.subr.bf16.mxu0 0
  %614 = vmatpush1.bf16.msra.mxu0 %v456
  %615 = vmatprep.subr.bf16.mxu0 0
  %616 = vmatpush1.bf16.msra.mxu0 %v457
  %617 = vmatprep.subr.bf16.mxu0 0
  %618 = vmatpush1.bf16.msra.mxu0 %v458
  %619 = vmatprep.subr.bf16.mxu0 0
  %620 = vmatpush1.bf16.msra.mxu0 %v459
  %621 = vmatprep.subr.bf16.mxu0 0
  %622 = vmatpush1.bf16.msra.mxu0 %v460
  %623 = vmatprep.subr.bf16.mxu0 0
  %624 = vmatpush1.bf16.msra.mxu0 %v461
  %625 = vmatprep.subr.bf16.mxu0 0
  %626 = vmatpush1.bf16.msra.mxu0 %v462
  %627 = vmatprep.subr.bf16.mxu0 0
  %628 = vmatpush1.bf16.msra.mxu0 %v463
  %629 = vmatprep.subr.bf16.mxu0 0
  %630 = vmatpush1.bf16.msra.mxu0 %v464
  %631 = vmatprep.subr.bf16.mxu0 0
  %632 = vmatpush1.bf16.msra.mxu0 %v465
  %633 = vmatprep.subr.bf16.mxu0 0
  %634 = vmatpush1.bf16.msra.mxu0 %v466
  %635 = vmatprep.subr.bf16.mxu0 0
  %636 = vmatpush1.bf16.msra.mxu0 %v467
  %637 = vmatprep.mubr.bf16.mxu0 %v40
  %638 = vmatmul.mubr.bf16.gmra.mrb[0].mxu0 %v39
  %v639 = vpop.f32.mrb[0].mxu0
  %v640 = vadd.f32 %v599, %v639
  %v641 = vpop.f32.mrb[0].mxu0
  %v642 = vpop.f32.mrb[0].mxu0
  %v643 = vadd.f32 %v602, %v642
  %v644 = vpop.f32.mrb[0].mxu0
  %645 = vdwg.mxu0
  %646 = vmatprep.subr.bf16.mxu0 0
  %647 = vmatpush1.bf16.msra.mxu0 %v468
  %648 = vmatprep.subr.bf16.mxu0 0
  %649 = vmatpush1.bf16.msra.mxu0 %v469
  %650 = vmatprep.subr.bf16.mxu0 0
  %651 = vmatpush1.bf16.msra.mxu0 %v470
  %652 = vmatprep.subr.bf16.mxu0 0
  %653 = vmatpush1.bf16.msra.mxu0 %v471
  %654 = vmatprep.subr.bf16.mxu0 0
  %655 = vmatpush1.bf16.msra.mxu0 %v472
  %656 = vmatprep.subr.bf16.mxu0 0
  %657 = vmatpush1.bf16.msra.mxu0 %v473
  %658 = vmatprep.subr.bf16.mxu0 0
  %659 = vmatpush1.bf16.msra.mxu0 %v474
  %660 = vmatprep.subr.bf16.mxu0 0
  %661 = vmatpush1.bf16.msra.mxu0 %v475
  %662 = vmatprep.subr.bf16.mxu0 0
  %663 = vmatpush1.bf16.msra.mxu0 %v476
  %664 = vmatprep.subr.bf16.mxu0 0
  %665 = vmatpush1.bf16.msra.mxu0 %v477
  %666 = vmatprep.subr.bf16.mxu0 0
  %667 = vmatpush1.bf16.msra.mxu0 %v478
  %668 = vmatprep.subr.bf16.mxu0 0
  %669 = vmatpush1.bf16.msra.mxu0 %v479
  %670 = vmatprep.subr.bf16.mxu0 0
  %671 = vmatpush1.bf16.msra.mxu0 %v480
  %672 = vmatprep.subr.bf16.mxu0 0
  %673 = vmatpush1.bf16.msra.mxu0 %v481
  %674 = vmatprep.subr.bf16.mxu0 0
  %675 = vmatpush1.bf16.msra.mxu0 %v482
  %676 = vmatprep.subr.bf16.mxu0 0
  %677 = vmatpush1.bf16.msra.mxu0 %v483
  %678 = vmatprep.mubr.bf16.mxu0 %v42
  %679 = vmatmul.mubr.bf16.gmra.mrb[0].mxu0 %v41
  %v680 = vpop.f32.mrb[0].mxu0
  %v681 = vadd.f32 %v640, %v680
  %v682 = vpop.f32.mrb[0].mxu0
  %v683 = vpop.f32.mrb[0].mxu0
  %v684 = vadd.f32 %v643, %v683
  %v685 = vpop.f32.mrb[0].mxu0
  %686 = vdwg.mxu0
  %687 = vmatprep.subr.bf16.mxu0 0
  %688 = vmatpush1.bf16.msra.mxu0 %v484
  %689 = vmatprep.subr.bf16.mxu0 0
  %690 = vmatpush1.bf16.msra.mxu0 %v485
  %691 = vmatprep.subr.bf16.mxu0 0
  %692 = vmatpush1.bf16.msra.mxu0 %v486
  %693 = vmatprep.subr.bf16.mxu0 0
  %694 = vmatpush1.bf16.msra.mxu0 %v487
  %695 = vmatprep.subr.bf16.mxu0 0
  %696 = vmatpush1.bf16.msra.mxu0 %v488
  %697 = vmatprep.subr.bf16.mxu0 0
  %698 = vmatpush1.bf16.msra.mxu0 %v489
  %699 = vmatprep.subr.bf16.mxu0 0
  %700 = vmatpush1.bf16.msra.mxu0 %v490
  %701 = vmatprep.subr.bf16.mxu0 0
  %702 = vmatpush1.bf16.msra.mxu0 %v491
  %703 = vmatprep.subr.bf16.mxu0 0
  %704 = vmatpush1.bf16.msra.mxu0 %v492
  %705 = vmatprep.subr.bf16.mxu0 0
  %706 = vmatpush1.bf16.msra.mxu0 %v493
  %707 = vmatprep.subr.bf16.mxu0 0
  %708 = vmatpush1.bf16.msra.mxu0 %v494
  %709 = vmatprep.subr.bf16.mxu0 0
  %710 = vmatpush1.bf16.msra.mxu0 %v495
  %711 = vmatprep.subr.bf16.mxu0 0
  %712 = vmatpush1.bf16.msra.mxu0 %v496
  %713 = vmatprep.subr.bf16.mxu0 0
  %714 = vmatpush1.bf16.msra.mxu0 %v497
  %715 = vmatprep.subr.bf16.mxu0 0
  %716 = vmatpush1.bf16.msra.mxu0 %v498
  %717 = vmatprep.subr.bf16.mxu0 0
  %718 = vmatpush1.bf16.msra.mxu0 %v499
  %719 = vmatprep.mubr.bf16.mxu0 %v44
  %720 = vmatmul.mubr.bf16.gmra.mrb[0].mxu0 %v43
  %v721 = vpop.f32.mrb[0].mxu0
  %v722 = vadd.f32 %v681, %v721
  %v723 = vpop.f32.mrb[0].mxu0
  %v724 = vpop.f32.mrb[0].mxu0
  %v725 = vadd.f32 %v684, %v724
  %v726 = vpop.f32.mrb[0].mxu0
  %727 = vdwg.mxu0
  %v728 = vmax.f32 %v722, 0.0
  %v729 = vmax.f32 %v725, 0.0
  %v730 = vld [vmem:[%s3] sm:$0x3]
  %v731 = vld [vmem:[%s4] sm:$0x3]
  %733 = vset.pattern.permute.xlu0 0
  %734 = vperm.xlu0 %733, %v731
  %v735 = vpop.permute.xlu0 %734
  %vm737 = vcmask 162816
  %v739 = vsel %vm737, %v730, 0
  %v742 = vsel %vm737, %v728, 0
  %v745 = vsel %vm737, %v729, 0
  %747 = vmatprep.subr.mxu0 0.0
  %748 = vmatpush1.xpose.msra.mxu0 %v742
  %749 = vmatprep.subr.mxu0 0.0
  %750 = vmatpush1.xpose.msra.mxu0 %v745
  %751 = vmatprep.subr.mxu0 0.0
  %752 = vmatpush1.xpose.msra.mxu0 0.0
  %753 = vmatprep.subr.mxu0 0.0
  %754 = vmatpush1.xpose.msra.mxu0 0.0
  %755 = vmatprep.subr.mxu0 0.0
  %756 = vmatpush1.xpose.msra.mxu0 0.0
  %757 = vmatprep.subr.mxu0 0.0
  %758 = vmatpush1.xpose.msra.mxu0 0.0
  %759 = vmatprep.subr.mxu0 0.0
  %760 = vmatpush1.xpose.msra.mxu0 0.0
  %761 = vmatprep.subr.mxu0 0.0
  %762 = vmatpush1.xpose.msra.mxu0 0.0
  %763 = vmatprep.subr.mxu0 0.0
  %764 = vmatpush1.xpose.msra.mxu0 0.0
  %765 = vmatprep.subr.mxu0 0.0
  %766 = vmatpush1.xpose.msra.mxu0 0.0
  %767 = vmatprep.subr.mxu0 0.0
  %768 = vmatpush1.xpose.msra.mxu0 0.0
  %769 = vmatprep.subr.mxu0 0.0
  %770 = vmatpush1.xpose.msra.mxu0 0.0
  %771 = vmatprep.subr.mxu0 0.0
  %772 = vmatpush1.xpose.msra.mxu0 0.0
  %773 = vmatprep.subr.mxu0 0.0
  %774 = vmatpush1.xpose.msra.mxu0 0.0
  %775 = vmatprep.subr.mxu0 0.0
  %776 = vmatpush1.xpose.msra.mxu0 0.0
  %777 = vmatprep.subr.mxu0 0.0
  %778 = vmatpush1.xpose.msra.mxu0 0.0
  %779 = vmatprep.subr.mxu0 0.0
  %780 = vmatpush1.xpose.msra.mxu0 0.0
  %781 = vmatprep.subr.mxu0 0.0
  %782 = vmatpush1.xpose.msra.mxu0 0.0
  %783 = vmatprep.subr.mxu0 0.0
  %784 = vmatpush1.xpose.msra.mxu0 0.0
  %785 = vmatprep.subr.mxu0 0.0
  %786 = vmatpush1.xpose.msra.mxu0 0.0
  %787 = vmatprep.subr.mxu0 0.0
  %788 = vmatpush1.xpose.msra.mxu0 0.0
  %789 = vmatprep.subr.mxu0 0.0
  %790 = vmatpush1.xpose.msra.mxu0 0.0
  %791 = vmatprep.subr.mxu0 0.0
  %792 = vmatpush1.xpose.msra.mxu0 0.0
  %793 = vmatprep.subr.mxu0 0.0
  %794 = vmatpush1.xpose.msra.mxu0 0.0
  %795 = vmatprep.subr.mxu0 0.0
  %796 = vmatpush1.xpose.msra.mxu0 0.0
  %797 = vmatprep.subr.mxu0 0.0
  %798 = vmatpush1.xpose.msra.mxu0 0.0
  %799 = vmatprep.subr.mxu0 0.0
  %800 = vmatpush1.xpose.msra.mxu0 0.0
  %801 = vmatprep.subr.mxu0 0.0
  %802 = vmatpush1.xpose.msra.mxu0 0.0
  %803 = vmatprep.subr.mxu0 0.0
  %804 = vmatpush1.xpose.msra.mxu0 0.0
  %805 = vmatprep.subr.mxu0 0.0
  %806 = vmatpush1.xpose.msra.mxu0 0.0
  %807 = vmatprep.subr.mxu0 0.0
  %808 = vmatpush1.xpose.msra.mxu0 0.0
  %809 = vmatprep.subr.mxu0 0.0
  %810 = vmatpush1.xpose.msra.mxu0 0.0
  %811 = vmatprep.mubr.f32.mxu0 0.0
  %812 = vmatmul.mubr.f32.gmra.mrb[0].mxu0 %v739
  %v813 = vpop.f32.mrb[0].mxu0
  %v814 = vadd.f32 %v735, %v813
  %v815 = vpop.f32.mrb[0].mxu0
  %816 = vdwg.mxu0
  %vm817 = vcmask 123904
  %818 = vst.msk [vmem:[%s5] sm:$0x3] %vm817, %v814
  // Predicated region
  $region22: #{mymodel_forward.1} parent=0 // pred_check
    _
  $region23: #{mymodel_forward.1} parent=0 // pred_check_branch
    %820 = sbr.rel (0) target = $region25
  $region24: #{mymodel_forward.1} parent=0 // pred_region
    _
  $region25: #{mymodel_forward.1} parent=0 // pred_fallthru
    _
  // Predicated region
  $region26: #{mymodel_forward.1} parent=0 // pred_check
    _
  $region27: #{mymodel_forward.1} parent=0 // pred_check_branch
    %822 = sbr.rel (0) target = $region29
  $region28: #{mymodel_forward.1} parent=0 // pred_region
    _
  $region29: #{mymodel_forward.1} parent=0 // pred_fallthru
    _

</llo_original>
